<compile_context>
chip_gen: v6e
topology: v6e:2x2x1
jax: 0.10.0
libtpu: 0.0.40
codegen_flags: <defaults>
</compile_context>

<pallas_src>
import jax
import jax.numpy as jnp
from jax.experimental import pallas as pl
from jax.experimental.pallas import tpu as pltpu


def _round_up(x, m):
    return (x + m - 1) // m * m


def _vmem_capacity_bytes():
    try:
        return int(pltpu.get_tpu_info().vmem_capacity_bytes)
    except Exception:
        return 64 << 20          # conservative default (v7x per-TC VMEM)


# ---------------------------------------------------------------------------
# Kernels
# ---------------------------------------------------------------------------
def gfem_kernel_fused(x_ref, w1_ref, t1_ref, w2_ref, t2_ref, o_ref):
    """Single-block path: whole K resident, one grid axis over batch tiles.

    x_ref  : [TB, K ]  bf16   activation tile (native [B, N*C] flatten)
    w1_ref : [K , Hp]  bf16   layer-1 weight (BN1 scale folded in)
    t1_ref : [1 , Hp]  f32    folded bias + BN1 shift
    w2_ref : [Hp, Cp]  bf16   layer-2 weight (BN2 scale folded in)
    t2_ref : [1 , Cp]  f32    folded bias + BN2 shift
    o_ref  : [TB, Cp]  f32    output tile
    """
    acc = jnp.dot(x_ref[...], w1_ref[...], preferred_element_type=jnp.float32)
    h = jnp.maximum(acc + t1_ref[...], 0.0).astype(jnp.bfloat16)   # norm1 + ReLU
    y = jnp.dot(h, w2_ref[...], preferred_element_type=jnp.float32) + t2_ref[...]
    o_ref[...] = jnp.maximum(y, 0.0)                               # norm2 + ReLU


def gfem_kernel_ksplit(x_ref, w1_ref, t1_ref, w2_ref, t2_ref, o_ref, acc_ref):
    """K-streaming path: grid = (batch tiles, K tiles), K reduction last."""
    k = pl.program_id(1)
    partial = jnp.dot(x_ref[...], w1_ref[...],
                      preferred_element_type=jnp.float32)

    @pl.when(k == 0)
    def _():
        acc_ref[...] = partial                 # write-on-first-k: no zero-fill

    @pl.when(k > 0)
    def _():
        acc_ref[...] += partial

    @pl.when(k == pl.num_programs(1) - 1)
    def _():
        h = jnp.maximum(acc_ref[...] + t1_ref[...], 0.0).astype(jnp.bfloat16)
        y = jnp.dot(h, w2_ref[...],
                    preferred_element_type=jnp.float32) + t2_ref[...]
        o_ref[...] = jnp.maximum(y, 0.0)


# ---------------------------------------------------------------------------
# One-time parameter preparation (fold BN + biases, permute, pad, cast)
# ---------------------------------------------------------------------------
def prepare_gfem_params(params, eps=1e-5):
    """Fold/permute/pad the static weights once (cache the result)."""
    w1 = params["w1"]                          # [4C, C, N]  (Conv1d weight)
    hid, C, N = int(w1.shape[0]), int(w1.shape[1]), int(w1.shape[2])
    K = N * C

    # Eval-mode BN folded to per-channel scale/shift.
    # TODO(synk): training-mode SyncBN (batch stats + cross-replica reduce) is
    # not reproduced; eval semantics (running stats) are implemented here.
    s1 = params["bn1_gamma"] / jnp.sqrt(params["bn1_var"] + eps)
    t1 = params["bn1_beta"] + (params["b1"] - params["bn1_mean"]) * s1
    s2 = params["bn2_gamma"] / jnp.sqrt(params["bn2_var"] + eps)
    t2 = params["bn2_beta"] + (params["b2"] - params["bn2_mean"]) * s2

    # Match x's native [B, N*C] flattening:  W1p[n*C + c, o] = w1[o, c, n].
    w1p = jnp.transpose(w1, (2, 1, 0)).reshape(K, hid) * s1[None, :]
    # Conv1d(4C, C, kernel=1) -> [4C, C], BN2 scale folded into the columns.
    w2p = params["w2"].reshape(C, hid).T * s2[None, :]

    Hp = _round_up(hid, 128)
    Cp = _round_up(C, 128)

    vmem_cap = _vmem_capacity_bytes()
    w1_full_bytes = _round_up(K, 8) * Hp * 2           # bf16 W1, fully resident
    single_block = w1_full_bytes <= vmem_cap // 4      # fused path threshold

    if single_block:
        # No K padding at all: full-dim blocks are always legal, and skipping
        # the pad keeps the wrapper-side pass over x to just the bf16 cast.
        TK = Kp = K
    else:
        # Stream W1 over K; size the (double-buffered) tile from real VMEM.
        tk_budget = vmem_cap // 8                      # per-buffer W1 tile budget
        TK = max(128, (tk_budget // (Hp * 2)) // 128 * 128)
        TK = min(TK, _round_up(K, 128))
        Kp = _round_up(K, TK)

    w1p = jnp.pad(w1p, ((0, Kp - K), (0, Hp - hid))).astype(jnp.bfloat16)
    t1p = jnp.pad(t1, (0, Hp - hid)).reshape(1, Hp).astype(jnp.float32)
    w2p = jnp.pad(w2p, ((0, Hp - hid), (0, Cp - C))).astype(jnp.bfloat16)
    t2p = jnp.pad(t2, (0, Cp - C)).reshape(1, Cp).astype(jnp.float32)

    return {"w1p": w1p, "t1p": t1p, "w2p": w2p, "t2p": t2p,
            "C": C, "N": N, "hid": hid, "K": K, "Kp": Kp,
            "Hp": Hp, "Cp": Cp, "TK": TK,
            "single_block": single_block, "vmem_cap": vmem_cap}


# ---------------------------------------------------------------------------
# Batch-tile heuristic
# ---------------------------------------------------------------------------
def _batch_tile(B, vmem_cap, single_block):
    # bf16 packs 16 rows per vreg sublane group -> multiples of 16.
    cap = 256 if (B >= 256 and vmem_cap >= (96 << 20)) else 128
    TB = min(cap, _round_up(B, 16))
    # v7x has 2 TensorCores: when the weights are resident (no extra HBM cost),
    # make sure the "parallel" batch axis has at least 2 tiles to feed both.
    if single_block and B >= 32 and _round_up(B, TB) // TB < 2:
        TB = _round_up(-(-B // 2), 16)
    return TB


# ---------------------------------------------------------------------------
# Forward wrapper
# ---------------------------------------------------------------------------
def gfem_forward(x, prep):
    """x: [B, num_nodes, C]  ->  [B, 1, C]  (float32)."""
    B, N, C = x.shape
    assert N == prep["N"] and C == prep["C"]
    K, Kp, Hp, Cp, TK = prep["K"], prep["Kp"], prep["Hp"], prep["Cp"], prep["TK"]
    vmem_cap = prep["vmem_cap"]
    single_block = prep["single_block"]

    TB = _batch_tile(B, vmem_cap, single_block)
    Bp = _round_up(B, TB)
    n_btiles = Bp // TB

    # Native flatten -- no activation transpose (W1 was permuted instead).
    x_flat = x.reshape(B, K)
    if x_flat.dtype != jnp.bfloat16:
        x_flat = x_flat.astype(jnp.bfloat16)
    if (Bp, Kp) != (B, K):
        x_flat = jnp.pad(x_flat, ((0, Bp - B), (0, Kp - K)))

    TKp = _round_up(TK, 128)
    TBp = _round_up(TB, 16)

    def _vmem_need(single_buffer):
        nb = 1 if single_buffer else 2
        need = 2 * TBp * TKp * 2                              # x, bf16, 2 buffers
        need += (nb if single_block else 2) * TKp * Hp * 2    # W1, bf16
        need += nb * (Hp * 4 + Hp * Cp * 2 + Cp * 4)          # t1 / W2 / t2
        need += 2 * TBp * Cp * 4                              # out, f32, 2 buffers
        if not single_block:
            need += TBp * Hp * 4                              # accumulator scratch
        need += 2 * TBp * Hp * 4                              # epilogue temporaries
        return need

    def _vmem_limit(need):
        # Tight on 64 MiB parts (v7x), generous on 128 MiB parts (v5e/v6e).
        cap = (40 << 20) if vmem_cap <= (64 << 20) else (96 << 20)
        lim = max(need + (4 << 20), 16 << 20)
        if lim > cap:
            lim = max(cap, need + (2 << 20))
        return int(lim)

    # W1 is re-streamed once per batch tile in the K-split path only.
    w1_reads = 1 if single_block else n_btiles
    hid = prep["hid"]
    cost = pl.CostEstimate(
        flops=2 * Bp * Kp * Hp + 2 * Bp * Hp * Cp,
        transcendentals=0,
        bytes_accessed=(Bp * Kp * 2 + w1_reads * Kp * Hp * 2
                        + Hp * Cp * 2 + (Hp + Cp) * 4 + Bp * Cp * 4),
    )

    def _call(single_buffer):
        # Grid-constant operands don't need a second pipeline buffer.
        const_kw = dict(pipeline_mode=pl.Buffered(1)) if single_buffer else {}

        if single_block:
            grid = (n_btiles,)
            kernel = gfem_kernel_fused
            in_specs = [
                pl.BlockSpec((TB, Kp), lambda i: (i, 0)),               # x tile
                pl.BlockSpec((Kp, Hp), lambda i: (0, 0), **const_kw),   # W1 resident
                pl.BlockSpec((1, Hp), lambda i: (0, 0), **const_kw),    # t1
                pl.BlockSpec((Hp, Cp), lambda i: (0, 0), **const_kw),   # W2
                pl.BlockSpec((1, Cp), lambda i: (0, 0), **const_kw),    # t2
            ]
            out_spec = pl.BlockSpec((TB, Cp), lambda i: (i, 0))
            scratch = []
            dims = ("parallel",)
        else:
            grid = (n_btiles, Kp // TK)
            kernel = gfem_kernel_ksplit
            in_specs = [
                pl.BlockSpec((TB, TK), lambda i, k: (i, k)),               # x tile
                pl.BlockSpec((TK, Hp), lambda i, k: (k, 0)),               # W1 streamed
                pl.BlockSpec((1, Hp), lambda i, k: (0, 0), **const_kw),    # t1
                pl.BlockSpec((Hp, Cp), lambda i, k: (0, 0), **const_kw),   # W2
                pl.BlockSpec((1, Cp), lambda i, k: (0, 0), **const_kw),    # t2
            ]
            out_spec = pl.BlockSpec((TB, Cp), lambda i, k: (i, 0))
            scratch = [pltpu.VMEM((TB, Hp), jnp.float32)]
            dims = ("parallel", "arbitrary")

        return pl.pallas_call(
            kernel,
            out_shape=jax.ShapeDtypeStruct((Bp, Cp), jnp.float32),
            grid_spec=pltpu.PrefetchScalarGridSpec(
                num_scalar_prefetch=0,
                grid=grid,
                in_specs=in_specs,
                out_specs=out_spec,
                scratch_shapes=scratch,
            ),
            compiler_params=pltpu.CompilerParams(
                dimension_semantics=dims,
                vmem_limit_bytes=_vmem_limit(_vmem_need(single_buffer)),
            ),
            cost_estimate=cost,
        )(x_flat, prep["w1p"], prep["t1p"], prep["w2p"], prep["t2p"])

    try:
        out = jax.block_until_ready(_call(single_buffer=True))
    except Exception:
        # pl.Buffered(1) single-buffering of grid-constant operands is a VMEM
        # optimization only; fall back to default double-buffered specs.
        out = jax.block_until_ready(_call(single_buffer=False))

    return out[:B, :C].reshape(B, 1, C)


# ---------------------------------------------------------------------------
# Pure-JAX reference (eval-mode BN), mirrors the PyTorch module in f32
# ---------------------------------------------------------------------------
def gfem_reference(x, params):
    B, N, C = x.shape
    hid = 4 * C
    eps = 1e-5
    xp = jnp.transpose(x, (0, 2, 1))                               # [B, C, N]
    h = jnp.einsum("bik,oik->bo", xp, params["w1"]) + params["b1"]
    h = (h - params["bn1_mean"]) / jnp.sqrt(params["bn1_var"] + eps)
    h = h * params["bn1_gamma"] + params["bn1_beta"]
    h = jnp.maximum(h, 0.0)
    w2 = params["w2"].reshape(C, hid)
    y = h @ w2.T + params["b2"]
    y = (y - params["bn2_mean"]) / jnp.sqrt(params["bn2_var"] + eps)
    y = y * params["bn2_gamma"] + params["bn2_beta"]
    y = jnp.maximum(y, 0.0)
    return y.reshape(B, 1, C)


def make_params(key, in_dim, num_classes):
    C, N, hid = in_dim, num_classes, 4 * in_dim
    k1, k2, k3, k4 = jax.random.split(key, 4)
    bound1 = 1.0 / (C * N) ** 0.5
    bound2 = 1.0 / (hid * 1) ** 0.5
    return {
        "w1": jax.random.uniform(k1, (hid, C, N), jnp.float32, -bound1, bound1),
        "b1": jax.random.uniform(k2, (hid,), jnp.float32, -bound1, bound1),
        "w2": jax.random.uniform(k3, (C, hid, 1), jnp.float32, -bound2, bound2),
        "b2": jax.random.uniform(k4, (C,), jnp.float32, -bound2, bound2),
        "bn1_gamma": jnp.ones((hid,), jnp.float32),
        "bn1_beta": jnp.zeros((hid,), jnp.float32),
        "bn1_mean": jnp.zeros((hid,), jnp.float32),
        "bn1_var": jnp.ones((hid,), jnp.float32),
        "bn2_gamma": jnp.ones((C,), jnp.float32),
        "bn2_beta": jnp.zeros((C,), jnp.float32),
        "bn2_mean": jnp.zeros((C,), jnp.float32),
        "bn2_var": jnp.ones((C,), jnp.float32),
    }


if __name__ == "__main__":
    B, in_dim, num_classes = 2, 4, 8        # x: [batch, num_nodes=num_classes, c]
    key = jax.random.PRNGKey(0)
    kx, kp = jax.random.split(key)
    x = jax.random.normal(kx, (B, num_classes, in_dim), jnp.float32)
    params = make_params(kp, in_dim, num_classes)

    prep = prepare_gfem_params(params)       # one-time static weight prep
    out = gfem_forward(x, prep)
    out = jax.block_until_ready(out)

    ref = gfem_reference(x, params)
    assert out.shape == (B, 1, in_dim), out.shape
    # x / W1 / h / W2 run in bf16 on the MXU -> loosen tolerance vs f32 reference.
    assert jnp.allclose(out, ref, atol=5e-2, rtol=5e-2), (out, ref)
    print("KERNEL_OK")
</pallas_src>

<mosaic_0001>
module attributes {stable_mosaic.version = 11 : i64} {
  func.func @gfem_kernel_fused(%arg0: i32, %arg1: memref<16x32xbf16, #tpu.memory_space<vmem>>, %arg2: memref<32x128xbf16, #tpu.memory_space<vmem>>, %arg3: memref<1x128xf32, #tpu.memory_space<vmem>>, %arg4: memref<128x128xbf16, #tpu.memory_space<vmem>>, %arg5: memref<1x128xf32, #tpu.memory_space<vmem>>, %arg6: memref<16x128xf32, #tpu.memory_space<vmem>>) attributes {dimension_semantics = [#tpu.dimension_semantics<parallel>], iteration_bounds = array<i64: 1>, scalar_prefetch = 0 : i64, scratch_operands = 0 : i64, tpu.core_type = #tpu.core_type<tc>, window_params = [{transform_indices = @transform_0, window_bounds = array<i64: 16, 32>}, {pipeline_mode = #tpu.pipeline_mode<synchronous>, transform_indices = @transform_1, window_bounds = array<i64: 32, 128>}, {pipeline_mode = #tpu.pipeline_mode<synchronous>, transform_indices = @transform_2, window_bounds = array<i64: 1, 128>}, {pipeline_mode = #tpu.pipeline_mode<synchronous>, transform_indices = @transform_3, window_bounds = array<i64: 128, 128>}, {pipeline_mode = #tpu.pipeline_mode<synchronous>, transform_indices = @transform_4, window_bounds = array<i64: 1, 128>}, {transform_indices = @transform_5, window_bounds = array<i64: 16, 128>}]} {
    %c0 = arith.constant 0 : index
    %c0_0 = arith.constant 0 : index
    %0 = vector.load %arg1[%c0, %c0_0] : memref<16x32xbf16, #tpu.memory_space<vmem>>, vector<16x32xbf16>
    %c0_1 = arith.constant 0 : index
    %c0_2 = arith.constant 0 : index
    %1 = vector.load %arg2[%c0_1, %c0_2] : memref<32x128xbf16, #tpu.memory_space<vmem>>, vector<32x128xbf16>
    %cst = arith.constant dense<0.000000e+00> : vector<16x128xf32>
    %2 = tpu.matmul %0, %1, %cst {dimension_numbers = #tpu.dot_dimension_numbers<[1], [0], [0], [1], [0, 0, 1, 1], [], []>} : vector<16x32xbf16>, vector<32x128xbf16>, vector<16x128xf32> -> vector<16x128xf32>
    %c0_3 = arith.constant 0 : index
    %c0_4 = arith.constant 0 : index
    %3 = vector.load %arg3[%c0_3, %c0_4] : memref<1x128xf32, #tpu.memory_space<vmem>>, vector<1x128xf32>
    %4 = vector.broadcast %3 : vector<1x128xf32> to vector<16x128xf32>
    %5 = arith.addf %2, %4 : vector<16x128xf32>
    %cst_5 = arith.constant 0.000000e+00 : f32
    %6 = vector.broadcast %cst_5 : f32 to vector<16x128xf32>
    %7 = arith.maximumf %5, %6 : vector<16x128xf32>
    %8 = arith.truncf %7 : vector<16x128xf32> to vector<16x128xbf16>
    %c0_6 = arith.constant 0 : index
    %c0_7 = arith.constant 0 : index
    %9 = vector.load %arg4[%c0_6, %c0_7] : memref<128x128xbf16, #tpu.memory_space<vmem>>, vector<128x128xbf16>
    %cst_8 = arith.constant dense<0.000000e+00> : vector<16x128xf32>
    %10 = tpu.matmul %8, %9, %cst_8 {dimension_numbers = #tpu.dot_dimension_numbers<[1], [0], [0], [1], [0, 0, 1, 1], [], []>} : vector<16x128xbf16>, vector<128x128xbf16>, vector<16x128xf32> -> vector<16x128xf32>
    %c0_9 = arith.constant 0 : index
    %c0_10 = arith.constant 0 : index
    %11 = vector.load %arg5[%c0_9, %c0_10] : memref<1x128xf32, #tpu.memory_space<vmem>>, vector<1x128xf32>
    %12 = vector.broadcast %11 : vector<1x128xf32> to vector<16x128xf32>
    %13 = arith.addf %10, %12 : vector<16x128xf32>
    %cst_11 = arith.constant 0.000000e+00 : f32
    %14 = vector.broadcast %cst_11 : f32 to vector<16x128xf32>
    %15 = arith.maximumf %13, %14 : vector<16x128xf32>
    %c0_12 = arith.constant 0 : index
    %c0_13 = arith.constant 0 : index
    %16 = vector.load %arg6[%c0_12, %c0_13] : memref<16x128xf32, #tpu.memory_space<vmem>>, vector<16x128xf32>
    tpu.vector_store %arg6[%c0_12, %c0_13], %15 {strides = array<i32>} : memref<16x128xf32, #tpu.memory_space<vmem>>, vector<16x128xf32>,
    return
  }
  func.func @transform_0(%arg0: i32) -> (i32, i32) {
    %c0_i32 = arith.constant 0 : i32
    %c0_i32_0 = arith.constant 0 : i32
    return %arg0, %c0_i32 : i32, i32
  }
  func.func @transform_1(%arg0: i32) -> (i32, i32) {
    %c0_i32 = arith.constant 0 : i32
    %c0_i32_0 = arith.constant 0 : i32
    %c0_i32_1 = arith.constant 0 : i32
    return %c0_i32, %c0_i32_0 : i32, i32
  }
  func.func @transform_2(%arg0: i32) -> (i32, i32) {
    %c0_i32 = arith.constant 0 : i32
    %c0_i32_0 = arith.constant 0 : i32
    %c0_i32_1 = arith.constant 0 : i32
    return %c0_i32, %c0_i32_0 : i32, i32
  }
  func.func @transform_3(%arg0: i32) -> (i32, i32) {
    %c0_i32 = arith.constant 0 : i32
    %c0_i32_0 = arith.constant 0 : i32
    %c0_i32_1 = arith.constant 0 : i32
    return %c0_i32, %c0_i32_0 : i32, i32
  }
  func.func @transform_4(%arg0: i32) -> (i32, i32) {
    %c0_i32 = arith.constant 0 : i32
    %c0_i32_0 = arith.constant 0 : i32
    %c0_i32_1 = arith.constant 0 : i32
    return %c0_i32, %c0_i32_0 : i32, i32
  }
  func.func @transform_5(%arg0: i32) -> (i32, i32) {
    %c0_i32 = arith.constant 0 : i32
    %c0_i32_0 = arith.constant 0 : i32
    return %arg0, %c0_i32 : i32, i32
  }
}

module attributes {stable_mosaic.version = 11 : i64} {
  func.func @gfem_kernel_fused(%arg0: i32, %arg1: memref<16x32xbf16, #tpu.memory_space<vmem>>, %arg2: memref<32x128xbf16, #tpu.memory_space<vmem>>, %arg3: memref<1x128xf32, #tpu.memory_space<vmem>>, %arg4: memref<128x128xbf16, #tpu.memory_space<vmem>>, %arg5: memref<1x128xf32, #tpu.memory_space<vmem>>, %arg6: memref<16x128xf32, #tpu.memory_space<vmem>>) attributes {dimension_semantics = [#tpu.dimension_semantics<parallel>], iteration_bounds = array<i64: 1>, scalar_prefetch = 0 : i64, scratch_operands = 0 : i64, tpu.core_type = #tpu.core_type<tc>, window_params = [{transform_indices = @transform_0, window_bounds = array<i64: 16, 32>}, {pipeline_mode = #tpu.pipeline_mode<synchronous>, transform_indices = @transform_1, window_bounds = array<i64: 32, 128>}, {pipeline_mode = #tpu.pipeline_mode<synchronous>, transform_indices = @transform_2, window_bounds = array<i64: 1, 128>}, {pipeline_mode = #tpu.pipeline_mode<synchronous>, transform_indices = @transform_3, window_bounds = array<i64: 128, 128>}, {pipeline_mode = #tpu.pipeline_mode<synchronous>, transform_indices = @transform_4, window_bounds = array<i64: 1, 128>}, {transform_indices = @transform_5, window_bounds = array<i64: 16, 128>}]} {
    %c0 = arith.constant 0 : index
    %c0_0 = arith.constant 0 : index
    %0 = vector.load %arg1[%c0, %c0_0] : memref<16x32xbf16, #tpu.memory_space<vmem>>, vector<16x32xbf16>
    %c0_1 = arith.constant 0 : index
    %c0_2 = arith.constant 0 : index
    %1 = vector.load %arg2[%c0_1, %c0_2] : memref<32x128xbf16, #tpu.memory_space<vmem>>, vector<32x128xbf16>
    %cst = arith.constant dense<0.000000e+00> : vector<16x128xf32>
    %2 = tpu.matmul %0, %1, %cst {dimension_numbers = #tpu.dot_dimension_numbers<[1], [0], [0], [1], [0, 0, 1, 1], [], []>} : vector<16x32xbf16>, vector<32x128xbf16>, vector<16x128xf32> -> vector<16x128xf32>
    %c0_3 = arith.constant 0 : index
    %c0_4 = arith.constant 0 : index
    %3 = vector.load %arg3[%c0_3, %c0_4] : memref<1x128xf32, #tpu.memory_space<vmem>>, vector<1x128xf32>
    %4 = vector.broadcast %3 : vector<1x128xf32> to vector<16x128xf32>
    %5 = arith.addf %2, %4 : vector<16x128xf32>
    %cst_5 = arith.constant 0.000000e+00 : f32
    %6 = vector.broadcast %cst_5 : f32 to vector<16x128xf32>
    %7 = arith.maximumf %5, %6 : vector<16x128xf32>
    %8 = arith.truncf %7 : vector<16x128xf32> to vector<16x128xbf16>
    %c0_6 = arith.constant 0 : index
    %c0_7 = arith.constant 0 : index
    %9 = vector.load %arg4[%c0_6, %c0_7] : memref<128x128xbf16, #tpu.memory_space<vmem>>, vector<128x128xbf16>
    %cst_8 = arith.constant dense<0.000000e+00> : vector<16x128xf32>
    %10 = tpu.matmul %8, %9, %cst_8 {dimension_numbers = #tpu.dot_dimension_numbers<[1], [0], [0], [1], [0, 0, 1, 1], [], []>} : vector<16x128xbf16>, vector<128x128xbf16>, vector<16x128xf32> -> vector<16x128xf32>
    %c0_9 = arith.constant 0 : index
    %c0_10 = arith.constant 0 : index
    %11 = vector.load %arg5[%c0_9, %c0_10] : memref<1x128xf32, #tpu.memory_space<vmem>>, vector<1x128xf32>
    %12 = vector.broadcast %11 : vector<1x128xf32> to vector<16x128xf32>
    %13 = arith.addf %10, %12 : vector<16x128xf32>
    %cst_11 = arith.constant 0.000000e+00 : f32
    %14 = vector.broadcast %cst_11 : f32 to vector<16x128xf32>
    %15 = arith.maximumf %13, %14 : vector<16x128xf32>
    %c0_12 = arith.constant 0 : index
    %c0_13 = arith.constant 0 : index
    %16 = vector.load %arg6[%c0_12, %c0_13] : memref<16x128xf32, #tpu.memory_space<vmem>>, vector<16x128xf32>
    tpu.vector_store %arg6[%c0_12, %c0_13], %15 {strides = array<i32>} : memref<16x128xf32, #tpu.memory_space<vmem>>, vector<16x128xf32>,
    return
  }
  func.func @transform_0(%arg0: i32) -> (i32, i32) {
    %c0_i32 = arith.constant 0 : i32
    %c0_i32_0 = arith.constant 0 : i32
    return %arg0, %c0_i32 : i32, i32
  }
  func.func @transform_1(%arg0: i32) -> (i32, i32) {
    %c0_i32 = arith.constant 0 : i32
    %c0_i32_0 = arith.constant 0 : i32
    %c0_i32_1 = arith.constant 0 : i32
    return %c0_i32, %c0_i32_0 : i32, i32
  }
  func.func @transform_2(%arg0: i32) -> (i32, i32) {
    %c0_i32 = arith.constant 0 : i32
    %c0_i32_0 = arith.constant 0 : i32
    %c0_i32_1 = arith.constant 0 : i32
    return %c0_i32, %c0_i32_0 : i32, i32
  }
  func.func @transform_3(%arg0: i32) -> (i32, i32) {
    %c0_i32 = arith.constant 0 : i32
    %c0_i32_0 = arith.constant 0 : i32
    %c0_i32_1 = arith.constant 0 : i32
    return %c0_i32, %c0_i32_0 : i32, i32
  }
  func.func @transform_4(%arg0: i32) -> (i32, i32) {
    %c0_i32 = arith.constant 0 : i32
    %c0_i32_0 = arith.constant 0 : i32
    %c0_i32_1 = arith.constant 0 : i32
    return %c0_i32, %c0_i32_0 : i32, i32
  }
  func.func @transform_5(%arg0: i32) -> (i32, i32) {
    %c0_i32 = arith.constant 0 : i32
    %c0_i32_0 = arith.constant 0 : i32
    return %arg0, %c0_i32 : i32, i32
  }
}

</mosaic_0001>

<llo_original>
// kernel: tpu_custom_call.1
$region0: #{tpu_custom_call.1}
  #allocation0 [shape = 'u32[]', space=smem, size = 0x4, offset = 0x4, fixed_abs, tag = 'smem constant byte address 0x4 - core index']
  #allocation1 [shape = 'u32[144,128]{1,0:T(1,128)}', space=vmem, size = 0x12000, scoped, tag = 'internal scratch']
  %s0 = inlined_call_operand.hbm [shape: bf16[16,32], index: 0, kind: input, shape index: {}]
  %s1 = inlined_call_operand.hbm [shape: bf16[32,128], index: 1, kind: input, shape index: {}]
  %s2 = inlined_call_operand.vmem [shape: f32[1,128], index: 2, kind: input, shape index: {}]
  %s3 = inlined_call_operand.hbm [shape: bf16[128,128], index: 3, kind: input, shape index: {}]
  %s4 = inlined_call_operand.vmem [shape: f32[1,128], index: 4, kind: input, shape index: {}]
  %s5 = inlined_call_operand.hbm [shape: f32[16,128], index: 5, kind: output, shape index: {}]
  %s6 = sld [smem:[#allocation0]]
  $region42: #{tpu_custom_call.1} parent=0
    _
  %s8 = ssub.s32 1, %s6
  %s9 = scalar_select 0, %s8, %s6
  $region1: #{tpu_custom_call.1} parent=0
    #allocation2 [shape = 'u8[4096]{0}', space=vmem, size = 0x1000, scoped, tag = 'input window, operand 0, single buffered']
    #allocation3 [shape = 's32[1]{0}', space=sflag, size = 0x4, scoped, tag = 'scoped memory for tpu_custom_call.1']
    #allocation4 [shape = 's32[1]{0}', space=sflag, size = 0x4, scoped, tag = 'scoped memory for tpu_custom_call.1']
    #allocation5 [shape = 'u8[8192]{0}', space=vmem, size = 0x2000, scoped, tag = 'input window, operand 1, single buffered']
    #allocation6 [shape = 's32[1]{0}', space=sflag, size = 0x4, scoped, tag = 'scoped memory for tpu_custom_call.1']
    #allocation7 [shape = 'u8[32768]{0}', space=vmem, size = 0x8000, scoped, tag = 'input window, operand 3, single buffered']
    #allocation8 [shape = 'u8[8192]{0}', space=vmem, size = 0x2000, scoped, tag = 'output window, operand 0, single buffered']
    %10 = vsyncpa [#allocation3], 0
    %11 = vsyncpa [#allocation6], 0
    %12 = vsyncpa [#allocation4], 0
    // Predicated region
    $region2: #{tpu_custom_call.1} parent=1 // pred_check
      _
    $region3: #{tpu_custom_call.1} parent=1 // pred_check_branch
      %14 = sbr.rel (0) target = $region5
    $region4: #{tpu_custom_call.1} parent=1 // pred_region
      %s16 = ssub.s32 128, 128
      %17 = vsyncadd [#allocation3], %s16
      %s18 = sshll.u32 [#allocation2], 4
      %s19 = int_to_ptr.vmem [resolvable:$true] %s18
      %24 = dma.hbm_to_vmem [thread:$0]  %s0, 128, %s19, [#allocation3], 64, 64, 4
    $region5: #{tpu_custom_call.1} parent=1 // pred_fallthru
      _
    // Predicated region
    $region6: #{tpu_custom_call.1} parent=1 // pred_check
      _
    $region7: #{tpu_custom_call.1} parent=1 // pred_check_branch
      %26 = sbr.rel (0) target = $region9
    $region8: #{tpu_custom_call.1} parent=1 // pred_region
      %s28 = ssub.s32 256, 256
      %29 = vsyncadd [#allocation6], %s28
      %s30 = sshll.u32 [#allocation5], 4
      %s31 = int_to_ptr.vmem [resolvable:$true] %s30
      %36 = dma.hbm_to_vmem [thread:$0]  %s1, 256, %s31, [#allocation6], 64, 64, 4
    $region9: #{tpu_custom_call.1} parent=1 // pred_fallthru
      _
    // Predicated region
    $region10: #{tpu_custom_call.1} parent=1 // pred_check
      _
    $region11: #{tpu_custom_call.1} parent=1 // pred_check_branch
      %38 = sbr.rel (0) target = $region13
    $region12: #{tpu_custom_call.1} parent=1 // pred_region
      _
    $region13: #{tpu_custom_call.1} parent=1 // pred_fallthru
      _
    // Predicated region
    $region14: #{tpu_custom_call.1} parent=1 // pred_check
      _
    $region15: #{tpu_custom_call.1} parent=1 // pred_check_branch
      %40 = sbr.rel (0) target = $region17
    $region16: #{tpu_custom_call.1} parent=1 // pred_region
      %s42 = ssub.s32 1024, 1024
      %43 = vsyncadd [#allocation6], %s42
      %s44 = sshll.u32 [#allocation7], 4
      %s45 = int_to_ptr.vmem [resolvable:$true] %s44
      %50 = dma.hbm_to_vmem [thread:$0]  %s3, 1024, %s45, [#allocation6], 64, 64, 4
    $region17: #{tpu_custom_call.1} parent=1 // pred_fallthru
      _
    // Predicated region
    $region18: #{tpu_custom_call.1} parent=1 // pred_check
      _
    $region19: #{tpu_custom_call.1} parent=1 // pred_check_branch
      %52 = sbr.rel (0) target = $region21
    $region20: #{tpu_custom_call.1} parent=1 // pred_region
      _
    $region21: #{tpu_custom_call.1} parent=1 // pred_fallthru
      _
    // Predicated region
    $region22: #{tpu_custom_call.1} parent=1 // pred_check
      _
    $region23: #{tpu_custom_call.1} parent=1 // pred_check_branch
      %54 = sbr.rel (0) target = $region25
    $region24: #{tpu_custom_call.1} parent=1 // pred_region
      %55 = dma.done [#allocation3], 128
    $region25: #{tpu_custom_call.1} parent=1 // pred_fallthru
      _
    // Predicated region
    $region26: #{tpu_custom_call.1} parent=1 // pred_check
      _
    $region27: #{tpu_custom_call.1} parent=1 // pred_check_branch
      %57 = sbr.rel (0) target = $region29
    $region28: #{tpu_custom_call.1} parent=1 // pred_region
      %58 = dma.done [#allocation6], 256
    $region29: #{tpu_custom_call.1} parent=1 // pred_fallthru
      _
    // Predicated region
    $region30: #{tpu_custom_call.1} parent=1 // pred_check
      _
    $region31: #{tpu_custom_call.1} parent=1 // pred_check_branch
      %60 = sbr.rel (0) target = $region33
    $region32: #{tpu_custom_call.1} parent=1 // pred_region
      %61 = dma.done [#allocation6], 1024
    $region33: #{tpu_custom_call.1} parent=1 // pred_fallthru
      _
    %v63 = vld [vmem:[#allocation2] sm:$0xf]
    %v64 = vld [vmem:[#allocation2 + $0x4] sm:$0xf]
    %v65 = vld [vmem:[#allocation5] sm:$0xf]
    %v66 = vld [vmem:[#allocation5 + $0x4] sm:$0xf]
    %v67 = vld [vmem:[#allocation5 + $0x8] sm:$0xf]
    %v68 = vld [vmem:[#allocation5 + $0xc] sm:$0xf]
    %v69 = vld [vmem:[%s2] sm:$0x1]
    %v71 = vlaneseq
    %v72 = vshrl.u32 %v71, 7
    %v73 = vsub.s32 0, %v72
    %v74 = vrot.slane %v69, %v73
    %v78 = vunpack.c.l.b16 %v63
    %v79 = vunpack.c.l.b16 %v64
    %v80 = vpack.c.b16 %v79, %v78
    %v85 = vunpack.c.l.b16 %v65
    %v86 = vunpack.c.l.b16 %v66
    %v87 = vunpack.c.l.b16 %v67
    %v88 = vunpack.c.l.b16 %v68
    %v89 = vpack.c.b16 %v86, %v85
    %v90 = vpack.c.b16 %v88, %v87
    %vm93 = vcmask 261120
    %v95 = vsel %vm93, %v80, 0
    %97 = vmatprep.subr.bf16.mxu0 0
    %98 = vmatpush1.bf16.msra.mxu0 0
    %99 = vmatprep.subr.bf16.mxu0 0
    %100 = vmatpush1.bf16.msra.mxu0 0
    %101 = vmatprep.subr.bf16.mxu0 0
    %102 = vmatpush1.bf16.msra.mxu0 0
    %103 = vmatprep.subr.bf16.mxu0 0
    %104 = vmatpush1.bf16.msra.mxu0 0
    %105 = vmatprep.subr.bf16.mxu0 0
    %106 = vmatpush1.bf16.msra.mxu0 0
    %107 = vmatprep.subr.bf16.mxu0 0
    %108 = vmatpush1.bf16.msra.mxu0 0
    %109 = vmatprep.subr.bf16.mxu0 0
    %110 = vmatpush1.bf16.msra.mxu0 %v90
    %111 = vmatprep.subr.bf16.mxu0 0
    %112 = vmatpush1.bf16.msra.mxu0 %v89
    %113 = vmatprep.subr.bf16.mxu0 0
    %114 = vmatpush2.bf16.msra.mxu0 0
    %115 = vmatprep.subr.bf16.mxu0 0
    %116 = vmatpush2.bf16.msra.mxu0 0
    %117 = vmatprep.subr.bf16.mxu0 0
    %118 = vmatpush2.bf16.msra.mxu0 0
    %119 = vmatprep.subr.bf16.mxu0 0
    %120 = vmatpush2.bf16.msra.mxu0 0
    %121 = vmatprep.subr.bf16.mxu0 0
    %122 = vmatpush2.bf16.msra.mxu0 0
    %123 = vmatprep.subr.bf16.mxu0 0
    %124 = vmatpush2.bf16.msra.mxu0 0
    %125 = vmatprep.subr.bf16.mxu0 0
    %126 = vmatpush2.bf16.msra.mxu0 0
    %127 = vmatprep.subr.bf16.mxu0 0
    %128 = vmatpush2.bf16.msra.mxu0 0
    %129 = vmatprep.mubr.bf16.mxu0 0
    %130 = vmatmul.mubr.bf16.gmra.mxu0 %v95
    %v131 = vpop.f32.mrf.mxu0
    %v132 = vadd.f32 %v74, %v131
    %v133 = vpop.f32.mrf.mxu0
    %v134 = vpop.f32.mrf.mxu0
    %v135 = vadd.f32 %v74, %v134
    %v136 = vpop.f32.mrf.mxu0
    %137 = vdwg.mxu0
    %v138 = vmax.f32 %v132, 0.0
    %v139 = vmax.f32 %v135, 0.0
    %v140 = vpack.c.bf16 %v139, %v138
    %v141 = vld [vmem:[#allocation7] sm:$0xf]
    %v142 = vld [vmem:[#allocation7 + $0x4] sm:$0xf]
    %v143 = vld [vmem:[#allocation7 + $0x8] sm:$0xf]
    %v144 = vld [vmem:[#allocation7 + $0xc] sm:$0xf]
    %v145 = vld [vmem:[#allocation7 + $0x10] sm:$0xf]
    %v146 = vld [vmem:[#allocation7 + $0x14] sm:$0xf]
    %v147 = vld [vmem:[#allocation7 + $0x18] sm:$0xf]
    %v148 = vld [vmem:[#allocation7 + $0x1c] sm:$0xf]
    %v149 = vld [vmem:[#allocation7 + $0x20] sm:$0xf]
    %v150 = vld [vmem:[#allocation7 + $0x24] sm:$0xf]
    %v151 = vld [vmem:[#allocation7 + $0x28] sm:$0xf]
    %v152 = vld [vmem:[#allocation7 + $0x2c] sm:$0xf]
    %v153 = vld [vmem:[#allocation7 + $0x30] sm:$0xf]
    %v154 = vld [vmem:[#allocation7 + $0x34] sm:$0xf]
    %v155 = vld [vmem:[#allocation7 + $0x38] sm:$0xf]
    %v156 = vld [vmem:[#allocation7 + $0x3c] sm:$0xf]
    %v157 = vld [vmem:[%s4] sm:$0x1]
    %v159 = vlaneseq
    %v160 = vshrl.u32 %v159, 7
    %v161 = vsub.s32 0, %v160
    %v162 = vrot.slane %v157, %v161
    %v180 = vunpack.c.l.b16 %v141
    %v181 = vunpack.c.l.b16 %v142
    %v182 = vunpack.c.l.b16 %v143
    %v183 = vunpack.c.l.b16 %v144
    %v184 = vunpack.c.l.b16 %v145
    %v185 = vunpack.c.l.b16 %v146
    %v186 = vunpack.c.l.b16 %v147
    %v187 = vunpack.c.l.b16 %v148
    %v188 = vunpack.c.l.b16 %v149
    %v189 = vunpack.c.l.b16 %v150
    %v190 = vunpack.c.l.b16 %v151
    %v191 = vunpack.c.l.b16 %v152
    %v192 = vunpack.c.l.b16 %v153
    %v193 = vunpack.c.l.b16 %v154
    %v194 = vunpack.c.l.b16 %v155
    %v195 = vunpack.c.l.b16 %v156
    %v196 = vpack.c.b16 %v181, %v180
    %v197 = vpack.c.b16 %v183, %v182
    %v198 = vpack.c.b16 %v185, %v184
    %v199 = vpack.c.b16 %v187, %v186
    %v200 = vpack.c.b16 %v189, %v188
    %v201 = vpack.c.b16 %v191, %v190
    %v202 = vpack.c.b16 %v193, %v192
    %v203 = vpack.c.b16 %v195, %v194
    %212 = vmatprep.subr.bf16.mxu0 0
    %213 = vmatpush1.bf16.msra.mxu0 %v203
    %214 = vmatprep.subr.bf16.mxu0 0
    %215 = vmatpush1.bf16.msra.mxu0 %v202
    %216 = vmatprep.subr.bf16.mxu0 0
    %217 = vmatpush1.bf16.msra.mxu0 %v201
    %218 = vmatprep.subr.bf16.mxu0 0
    %219 = vmatpush1.bf16.msra.mxu0 %v200
    %220 = vmatprep.subr.bf16.mxu0 0
    %221 = vmatpush1.bf16.msra.mxu0 %v199
    %222 = vmatprep.subr.bf16.mxu0 0
    %223 = vmatpush1.bf16.msra.mxu0 %v198
    %224 = vmatprep.subr.bf16.mxu0 0
    %225 = vmatpush1.bf16.msra.mxu0 %v197
    %226 = vmatprep.subr.bf16.mxu0 0
    %227 = vmatpush1.bf16.msra.mxu0 %v196
    %228 = vmatprep.subr.bf16.mxu0 0
    %229 = vmatpush2.bf16.msra.mxu0 0
    %230 = vmatprep.subr.bf16.mxu0 0
    %231 = vmatpush2.bf16.msra.mxu0 0
    %232 = vmatprep.subr.bf16.mxu0 0
    %233 = vmatpush2.bf16.msra.mxu0 0
    %234 = vmatprep.subr.bf16.mxu0 0
    %235 = vmatpush2.bf16.msra.mxu0 0
    %236 = vmatprep.subr.bf16.mxu0 0
    %237 = vmatpush2.bf16.msra.mxu0 0
    %238 = vmatprep.subr.bf16.mxu0 0
    %239 = vmatpush2.bf16.msra.mxu0 0
    %240 = vmatprep.subr.bf16.mxu0 0
    %241 = vmatpush2.bf16.msra.mxu0 0
    %242 = vmatprep.subr.bf16.mxu0 0
    %243 = vmatpush2.bf16.msra.mxu0 0
    %244 = vmatprep.mubr.bf16.mxu0 0
    %245 = vmatmul.mubr.bf16.gmra.mxu0 %v140
    %v246 = vpop.f32.mrf.mxu0
    %v247 = vadd.f32 %v162, %v246
    %v248 = vpop.f32.mrf.mxu0
    %v249 = vpop.f32.mrf.mxu0
    %v250 = vadd.f32 %v162, %v249
    %v251 = vpop.f32.mrf.mxu0
    %252 = vdwg.mxu0
    %v253 = vmax.f32 %v247, 0.0
    %v254 = vmax.f32 %v250, 0.0
    %255 = vst [vmem:[#allocation8] sm:$0xff] %v253
    %256 = vst [vmem:[#allocation8 + $0x8] sm:$0xff] %v254
    // Predicated region
    $region34: #{tpu_custom_call.1} parent=1 // pred_check
      _
    $region35: #{tpu_custom_call.1} parent=1 // pred_check_branch
      %258 = sbr.rel (0) target = $region37
    $region36: #{tpu_custom_call.1} parent=1 // pred_region
      %s260 = ssub.s32 256, 256
      %261 = vsyncadd [#allocation4], %s260
      %s262 = sshll.u32 [#allocation8], 4
      %s263 = int_to_ptr.vmem [resolvable:$true] %s262
      %268 = dma.vmem_to_hbm [thread:$0]  %s263, 256, %s5, [#allocation4], 128, 128, 8
    $region37: #{tpu_custom_call.1} parent=1 // pred_fallthru
      _
    // Predicated region
    $region38: #{tpu_custom_call.1} parent=1 // pred_check
      _
    $region39: #{tpu_custom_call.1} parent=1 // pred_check_branch
      %270 = sbr.rel (0) target = $region41
    $region40: #{tpu_custom_call.1} parent=1 // pred_region
      %271 = dma.done [#allocation4], 256
    $region41: #{tpu_custom_call.1} parent=1 // pred_fallthru
      _
    %272 = vsyncpa [#allocation3], 1
    %273 = vsyncpa [#allocation6], 1
    %274 = vsyncpa [#allocation4], 1

// kernel: tpu_custom_call.1
$region0: #{tpu_custom_call.1}
  #allocation0 [shape = 'u32[]', space=smem, size = 0x4, offset = 0x4, fixed_abs, tag = 'smem constant byte address 0x4 - core index']
  #allocation1 [shape = 'u32[144,128]{1,0:T(1,128)}', space=vmem, size = 0x12000, scoped, tag = 'internal scratch']
  %s0 = inlined_call_operand.hbm [shape: bf16[16,32], index: 0, kind: input, shape index: {}]
  %s1 = inlined_call_operand.hbm [shape: bf16[32,128], index: 1, kind: input, shape index: {}]
  %s2 = inlined_call_operand.vmem [shape: f32[1,128], index: 2, kind: input, shape index: {}]
  %s3 = inlined_call_operand.hbm [shape: bf16[128,128], index: 3, kind: input, shape index: {}]
  %s4 = inlined_call_operand.vmem [shape: f32[1,128], index: 4, kind: input, shape index: {}]
  %s5 = inlined_call_operand.hbm [shape: f32[16,128], index: 5, kind: output, shape index: {}]
  %s6 = sld [smem:[#allocation0]]
  $region42: #{tpu_custom_call.1} parent=0
    _
  %s8 = ssub.s32 1, %s6
  %s9 = scalar_select 0, %s8, %s6
  $region1: #{tpu_custom_call.1} parent=0
    #allocation2 [shape = 'u8[4096]{0}', space=vmem, size = 0x1000, scoped, tag = 'input window, operand 0, single buffered']
    #allocation3 [shape = 's32[1]{0}', space=sflag, size = 0x4, scoped, tag = 'scoped memory for tpu_custom_call.1']
    #allocation4 [shape = 's32[1]{0}', space=sflag, size = 0x4, scoped, tag = 'scoped memory for tpu_custom_call.1']
    #allocation5 [shape = 'u8[8192]{0}', space=vmem, size = 0x2000, scoped, tag = 'input window, operand 1, single buffered']
    #allocation6 [shape = 's32[1]{0}', space=sflag, size = 0x4, scoped, tag = 'scoped memory for tpu_custom_call.1']
    #allocation7 [shape = 'u8[32768]{0}', space=vmem, size = 0x8000, scoped, tag = 'input window, operand 3, single buffered']
    #allocation8 [shape = 'u8[8192]{0}', space=vmem, size = 0x2000, scoped, tag = 'output window, operand 0, single buffered']
    %10 = vsyncpa [#allocation3], 0
    %11 = vsyncpa [#allocation6], 0
    %12 = vsyncpa [#allocation4], 0
    // Predicated region
    $region2: #{tpu_custom_call.1} parent=1 // pred_check
      _
    $region3: #{tpu_custom_call.1} parent=1 // pred_check_branch
      %14 = sbr.rel (0) target = $region5
    $region4: #{tpu_custom_call.1} parent=1 // pred_region
      %s16 = ssub.s32 128, 128
      %17 = vsyncadd [#allocation3], %s16
      %s18 = sshll.u32 [#allocation2], 4
      %s19 = int_to_ptr.vmem [resolvable:$true] %s18
      %24 = dma.hbm_to_vmem [thread:$0]  %s0, 128, %s19, [#allocation3], 64, 64, 4
    $region5: #{tpu_custom_call.1} parent=1 // pred_fallthru
      _
    // Predicated region
    $region6: #{tpu_custom_call.1} parent=1 // pred_check
      _
    $region7: #{tpu_custom_call.1} parent=1 // pred_check_branch
      %26 = sbr.rel (0) target = $region9
    $region8: #{tpu_custom_call.1} parent=1 // pred_region
      %s28 = ssub.s32 256, 256
      %29 = vsyncadd [#allocation6], %s28
      %s30 = sshll.u32 [#allocation5], 4
      %s31 = int_to_ptr.vmem [resolvable:$true] %s30
      %36 = dma.hbm_to_vmem [thread:$0]  %s1, 256, %s31, [#allocation6], 64, 64, 4
    $region9: #{tpu_custom_call.1} parent=1 // pred_fallthru
      _
    // Predicated region
    $region10: #{tpu_custom_call.1} parent=1 // pred_check
      _
    $region11: #{tpu_custom_call.1} parent=1 // pred_check_branch
      %38 = sbr.rel (0) target = $region13
    $region12: #{tpu_custom_call.1} parent=1 // pred_region
      _
    $region13: #{tpu_custom_call.1} parent=1 // pred_fallthru
      _
    // Predicated region
    $region14: #{tpu_custom_call.1} parent=1 // pred_check
      _
    $region15: #{tpu_custom_call.1} parent=1 // pred_check_branch
      %40 = sbr.rel (0) target = $region17
    $region16: #{tpu_custom_call.1} parent=1 // pred_region
      %s42 = ssub.s32 1024, 1024
      %43 = vsyncadd [#allocation6], %s42
      %s44 = sshll.u32 [#allocation7], 4
      %s45 = int_to_ptr.vmem [resolvable:$true] %s44
      %50 = dma.hbm_to_vmem [thread:$0]  %s3, 1024, %s45, [#allocation6], 64, 64, 4
    $region17: #{tpu_custom_call.1} parent=1 // pred_fallthru
      _
    // Predicated region
    $region18: #{tpu_custom_call.1} parent=1 // pred_check
      _
    $region19: #{tpu_custom_call.1} parent=1 // pred_check_branch
      %52 = sbr.rel (0) target = $region21
    $region20: #{tpu_custom_call.1} parent=1 // pred_region
      _
    $region21: #{tpu_custom_call.1} parent=1 // pred_fallthru
      _
    // Predicated region
    $region22: #{tpu_custom_call.1} parent=1 // pred_check
      _
    $region23: #{tpu_custom_call.1} parent=1 // pred_check_branch
      %54 = sbr.rel (0) target = $region25
    $region24: #{tpu_custom_call.1} parent=1 // pred_region
      %55 = dma.done [#allocation3], 128
    $region25: #{tpu_custom_call.1} parent=1 // pred_fallthru
      _
    // Predicated region
    $region26: #{tpu_custom_call.1} parent=1 // pred_check
      _
    $region27: #{tpu_custom_call.1} parent=1 // pred_check_branch
      %57 = sbr.rel (0) target = $region29
    $region28: #{tpu_custom_call.1} parent=1 // pred_region
      %58 = dma.done [#allocation6], 256
    $region29: #{tpu_custom_call.1} parent=1 // pred_fallthru
      _
    // Predicated region
    $region30: #{tpu_custom_call.1} parent=1 // pred_check
      _
    $region31: #{tpu_custom_call.1} parent=1 // pred_check_branch
      %60 = sbr.rel (0) target = $region33
    $region32: #{tpu_custom_call.1} parent=1 // pred_region
      %61 = dma.done [#allocation6], 1024
    $region33: #{tpu_custom_call.1} parent=1 // pred_fallthru
      _
    %v63 = vld [vmem:[#allocation2] sm:$0xf]
    %v64 = vld [vmem:[#allocation2 + $0x4] sm:$0xf]
    %v65 = vld [vmem:[#allocation5] sm:$0xf]
    %v66 = vld [vmem:[#allocation5 + $0x4] sm:$0xf]
    %v67 = vld [vmem:[#allocation5 + $0x8] sm:$0xf]
    %v68 = vld [vmem:[#allocation5 + $0xc] sm:$0xf]
    %v69 = vld [vmem:[%s2] sm:$0x1]
    %v71 = vlaneseq
    %v72 = vshrl.u32 %v71, 7
    %v73 = vsub.s32 0, %v72
    %v74 = vrot.slane %v69, %v73
    %v78 = vunpack.c.l.b16 %v63
    %v79 = vunpack.c.l.b16 %v64
    %v80 = vpack.c.b16 %v79, %v78
    %v85 = vunpack.c.l.b16 %v65
    %v86 = vunpack.c.l.b16 %v66
    %v87 = vunpack.c.l.b16 %v67
    %v88 = vunpack.c.l.b16 %v68
    %v89 = vpack.c.b16 %v86, %v85
    %v90 = vpack.c.b16 %v88, %v87
    %vm93 = vcmask 261120
    %v95 = vsel %vm93, %v80, 0
    %97 = vmatprep.subr.bf16.mxu0 0
    %98 = vmatpush1.bf16.msra.mxu0 0
    %99 = vmatprep.subr.bf16.mxu0 0
    %100 = vmatpush1.bf16.msra.mxu0 0
    %101 = vmatprep.subr.bf16.mxu0 0
    %102 = vmatpush1.bf16.msra.mxu0 0
    %103 = vmatprep.subr.bf16.mxu0 0
    %104 = vmatpush1.bf16.msra.mxu0 0
    %105 = vmatprep.subr.bf16.mxu0 0
    %106 = vmatpush1.bf16.msra.mxu0 0
    %107 = vmatprep.subr.bf16.mxu0 0
    %108 = vmatpush1.bf16.msra.mxu0 0
    %109 = vmatprep.subr.bf16.mxu0 0
    %110 = vmatpush1.bf16.msra.mxu0 %v90
    %111 = vmatprep.subr.bf16.mxu0 0
    %112 = vmatpush1.bf16.msra.mxu0 %v89
    %113 = vmatprep.subr.bf16.mxu0 0
    %114 = vmatpush2.bf16.msra.mxu0 0
    %115 = vmatprep.subr.bf16.mxu0 0
    %116 = vmatpush2.bf16.msra.mxu0 0
    %117 = vmatprep.subr.bf16.mxu0 0
    %118 = vmatpush2.bf16.msra.mxu0 0
    %119 = vmatprep.subr.bf16.mxu0 0
    %120 = vmatpush2.bf16.msra.mxu0 0
    %121 = vmatprep.subr.bf16.mxu0 0
    %122 = vmatpush2.bf16.msra.mxu0 0
    %123 = vmatprep.subr.bf16.mxu0 0
    %124 = vmatpush2.bf16.msra.mxu0 0
    %125 = vmatprep.subr.bf16.mxu0 0
    %126 = vmatpush2.bf16.msra.mxu0 0
    %127 = vmatprep.subr.bf16.mxu0 0
    %128 = vmatpush2.bf16.msra.mxu0 0
    %129 = vmatprep.mubr.bf16.mxu0 0
    %130 = vmatmul.mubr.bf16.gmra.mxu0 %v95
    %v131 = vpop.f32.mrf.mxu0
    %v132 = vadd.f32 %v74, %v131
    %v133 = vpop.f32.mrf.mxu0
    %v134 = vpop.f32.mrf.mxu0
    %v135 = vadd.f32 %v74, %v134
    %v136 = vpop.f32.mrf.mxu0
    %137 = vdwg.mxu0
    %v138 = vmax.f32 %v132, 0.0
    %v139 = vmax.f32 %v135, 0.0
    %v140 = vpack.c.bf16 %v139, %v138
    %v141 = vld [vmem:[#allocation7] sm:$0xf]
    %v142 = vld [vmem:[#allocation7 + $0x4] sm:$0xf]
    %v143 = vld [vmem:[#allocation7 + $0x8] sm:$0xf]
    %v144 = vld [vmem:[#allocation7 + $0xc] sm:$0xf]
    %v145 = vld [vmem:[#allocation7 + $0x10] sm:$0xf]
    %v146 = vld [vmem:[#allocation7 + $0x14] sm:$0xf]
    %v147 = vld [vmem:[#allocation7 + $0x18] sm:$0xf]
    %v148 = vld [vmem:[#allocation7 + $0x1c] sm:$0xf]
    %v149 = vld [vmem:[#allocation7 + $0x20] sm:$0xf]
    %v150 = vld [vmem:[#allocation7 + $0x24] sm:$0xf]
    %v151 = vld [vmem:[#allocation7 + $0x28] sm:$0xf]
    %v152 = vld [vmem:[#allocation7 + $0x2c] sm:$0xf]
    %v153 = vld [vmem:[#allocation7 + $0x30] sm:$0xf]
    %v154 = vld [vmem:[#allocation7 + $0x34] sm:$0xf]
    %v155 = vld [vmem:[#allocation7 + $0x38] sm:$0xf]
    %v156 = vld [vmem:[#allocation7 + $0x3c] sm:$0xf]
    %v157 = vld [vmem:[%s4] sm:$0x1]
    %v159 = vlaneseq
    %v160 = vshrl.u32 %v159, 7
    %v161 = vsub.s32 0, %v160
    %v162 = vrot.slane %v157, %v161
    %v180 = vunpack.c.l.b16 %v141
    %v181 = vunpack.c.l.b16 %v142
    %v182 = vunpack.c.l.b16 %v143
    %v183 = vunpack.c.l.b16 %v144
    %v184 = vunpack.c.l.b16 %v145
    %v185 = vunpack.c.l.b16 %v146
    %v186 = vunpack.c.l.b16 %v147
    %v187 = vunpack.c.l.b16 %v148
    %v188 = vunpack.c.l.b16 %v149
    %v189 = vunpack.c.l.b16 %v150
    %v190 = vunpack.c.l.b16 %v151
    %v191 = vunpack.c.l.b16 %v152
    %v192 = vunpack.c.l.b16 %v153
    %v193 = vunpack.c.l.b16 %v154
    %v194 = vunpack.c.l.b16 %v155
    %v195 = vunpack.c.l.b16 %v156
    %v196 = vpack.c.b16 %v181, %v180
    %v197 = vpack.c.b16 %v183, %v182
    %v198 = vpack.c.b16 %v185, %v184
    %v199 = vpack.c.b16 %v187, %v186
    %v200 = vpack.c.b16 %v189, %v188
    %v201 = vpack.c.b16 %v191, %v190
    %v202 = vpack.c.b16 %v193, %v192
    %v203 = vpack.c.b16 %v195, %v194
    %212 = vmatprep.subr.bf16.mxu0 0
    %213 = vmatpush1.bf16.msra.mxu0 %v203
    %214 = vmatprep.subr.bf16.mxu0 0
    %215 = vmatpush1.bf16.msra.mxu0 %v202
    %216 = vmatprep.subr.bf16.mxu0 0
    %217 = vmatpush1.bf16.msra.mxu0 %v201
    %218 = vmatprep.subr.bf16.mxu0 0
    %219 = vmatpush1.bf16.msra.mxu0 %v200
    %220 = vmatprep.subr.bf16.mxu0 0
    %221 = vmatpush1.bf16.msra.mxu0 %v199
    %222 = vmatprep.subr.bf16.mxu0 0
    %223 = vmatpush1.bf16.msra.mxu0 %v198
    %224 = vmatprep.subr.bf16.mxu0 0
    %225 = vmatpush1.bf16.msra.mxu0 %v197
    %226 = vmatprep.subr.bf16.mxu0 0
    %227 = vmatpush1.bf16.msra.mxu0 %v196
    %228 = vmatprep.subr.bf16.mxu0 0
    %229 = vmatpush2.bf16.msra.mxu0 0
    %230 = vmatprep.subr.bf16.mxu0 0
    %231 = vmatpush2.bf16.msra.mxu0 0
    %232 = vmatprep.subr.bf16.mxu0 0
    %233 = vmatpush2.bf16.msra.mxu0 0
    %234 = vmatprep.subr.bf16.mxu0 0
    %235 = vmatpush2.bf16.msra.mxu0 0
    %236 = vmatprep.subr.bf16.mxu0 0
    %237 = vmatpush2.bf16.msra.mxu0 0
    %238 = vmatprep.subr.bf16.mxu0 0
    %239 = vmatpush2.bf16.msra.mxu0 0
    %240 = vmatprep.subr.bf16.mxu0 0
    %241 = vmatpush2.bf16.msra.mxu0 0
    %242 = vmatprep.subr.bf16.mxu0 0
    %243 = vmatpush2.bf16.msra.mxu0 0
    %244 = vmatprep.mubr.bf16.mxu0 0
    %245 = vmatmul.mubr.bf16.gmra.mxu0 %v140
    %v246 = vpop.f32.mrf.mxu0
    %v247 = vadd.f32 %v162, %v246
    %v248 = vpop.f32.mrf.mxu0
    %v249 = vpop.f32.mrf.mxu0
    %v250 = vadd.f32 %v162, %v249
    %v251 = vpop.f32.mrf.mxu0
    %252 = vdwg.mxu0
    %v253 = vmax.f32 %v247, 0.0
    %v254 = vmax.f32 %v250, 0.0
    %255 = vst [vmem:[#allocation8] sm:$0xff] %v253
    %256 = vst [vmem:[#allocation8 + $0x8] sm:$0xff] %v254
    // Predicated region
    $region34: #{tpu_custom_call.1} parent=1 // pred_check
      _
    $region35: #{tpu_custom_call.1} parent=1 // pred_check_branch
      %258 = sbr.rel (0) target = $region37
    $region36: #{tpu_custom_call.1} parent=1 // pred_region
      %s260 = ssub.s32 256, 256
      %261 = vsyncadd [#allocation4], %s260
      %s262 = sshll.u32 [#allocation8], 4
      %s263 = int_to_ptr.vmem [resolvable:$true] %s262
      %268 = dma.vmem_to_hbm [thread:$0]  %s263, 256, %s5, [#allocation4], 128, 128, 8
    $region37: #{tpu_custom_call.1} parent=1 // pred_fallthru
      _
    // Predicated region
    $region38: #{tpu_custom_call.1} parent=1 // pred_check
      _
    $region39: #{tpu_custom_call.1} parent=1 // pred_check_branch
      %270 = sbr.rel (0) target = $region41
    $region40: #{tpu_custom_call.1} parent=1 // pred_region
      %271 = dma.done [#allocation4], 256
    $region41: #{tpu_custom_call.1} parent=1 // pred_fallthru
      _
    %272 = vsyncpa [#allocation3], 1
    %273 = vsyncpa [#allocation6], 1
    %274 = vsyncpa [#allocation4], 1

</llo_original>
